<compile_context>
chip_gen: v5e
topology: v5e:2x2
jax: 0.10.0
libtpu: 0.0.40
codegen_flags: <defaults>
</compile_context>

<pallas_src>
import functools

import jax
import jax.numpy as jnp
from jax.experimental import pallas as pl
from jax.experimental.pallas import tpu as pltpu

_LANE = 128  # TPU vreg lane width; pad node and feature dims to multiples of it.


def _round_up(x, m):
    return ((x + m - 1) // m) * m


def _gcn_fused_kernel(*refs, num_layers):
    """Fused multi-layer GCN forward. All refs are whole arrays in VMEM.

    refs layout: a_ref, h_ref, w_0..w_{L-1}, b_0..b_{L-1}, o_ref
      a_ref: (Np, Np)          padded normalized adjacency
      h_ref: (Np, Fp_0)        padded input features
      w_i  : (Fp_i, Fp_{i+1})  padded layer weights (zero outside real block)
      b_i  : (1, Fp_{i+1})     padded layer bias
      o_ref: (Np, Fp_L)        padded output
    """
    a_ref, h_ref = refs[0], refs[1]
    w_refs = refs[2:2 + num_layers]
    b_refs = refs[2 + num_layers:2 + 2 * num_layers]
    o_ref = refs[2 + 2 * num_layers]

    a = a_ref[...]
    h = h_ref[...]
    for li in range(num_layers):
        # Feature transform first (cheaper order: N*F_in*F_out), then dense
        # neighborhood aggregation (N*N*F_out). Both run once, both are full
        # lane-dense MXU tiles with f32 accumulation.
        xw = jnp.dot(h, w_refs[li][...], preferred_element_type=jnp.float32)
        h = jnp.dot(a, xw, preferred_element_type=jnp.float32) + b_refs[li][...]
        if li != num_layers - 1:  # activation=None on the last GCNConv
            h = jnp.maximum(h, 0.0)
    o_ref[...] = h.astype(o_ref.dtype)


def gcn_forward(a_hat, features, params):
    """Full GCN forward: one fused pallas_call over lane-padded operands."""
    n = a_hat.shape[0]
    in_feats = features.shape[1]
    n_classes = params[-1][0].shape[1]
    num_layers = len(params)

    feat_dims = [in_feats] + [w.shape[1] for w, _ in params]
    feat_pads = [_round_up(d, _LANE) for d in feat_dims]
    n_pad = _round_up(n, _LANE)

    dt = jnp.float32
    # Zero-pad everything to lane-dense shapes. Zero padding is exact for the
    # real (N, n_classes) block, which is sliced back out below.
    a_p = jnp.zeros((n_pad, n_pad), dt).at[:n, :n].set(a_hat.astype(dt))
    h_p = jnp.zeros((n_pad, feat_pads[0]), dt).at[:n, :in_feats].set(
        features.astype(dt))
    w_ps, b_ps = [], []
    for li, (w, b) in enumerate(params):
        fi, fo = w.shape
        fpi, fpo = feat_pads[li], feat_pads[li + 1]
        w_ps.append(jnp.zeros((fpi, fpo), dt).at[:fi, :fo].set(w.astype(dt)))
        b_ps.append(
            jnp.zeros((1, fpo), dt).at[:, :fo].set(b.reshape(1, fo).astype(dt)))

    kernel = functools.partial(_gcn_fused_kernel, num_layers=num_layers)
    num_inputs = 2 + 2 * num_layers
    vmem_spec = pl.BlockSpec(memory_space=pltpu.MemorySpace.VMEM)

    out_pad = pl.pallas_call(
        kernel,
        out_shape=jax.ShapeDtypeStruct((n_pad, feat_pads[-1]), dt),
        in_specs=[vmem_spec] * num_inputs,
        out_specs=vmem_spec,
    )(a_p, h_p, *w_ps, *b_ps)

    # Slice the real nodes / classes back out (padding is discarded here).
    return out_pad[:n, :n_classes]


def make_params(key, in_feats, n_hidden, n_classes, n_layers):
    """Deterministic Glorot-style init matching GCN.__init__ layer shapes."""
    dims = [in_feats] + [n_hidden] * n_layers + [n_classes]
    params = []
    for li in range(len(dims) - 1):
        key, kw = jax.random.split(key)
        fan_in, fan_out = dims[li], dims[li + 1]
        scale = jnp.sqrt(6.0 / (fan_in + fan_out))
        w = jax.random.uniform(
            kw, (fan_in, fan_out), jnp.float32, minval=-scale, maxval=scale
        )
        b = jnp.zeros((1, fan_out), jnp.float32)
        params.append((w, b))
    return params


def make_normalized_adjacency(key, n_nodes, edge_prob=0.1):
    """Synthetic undirected graph -> dense A_hat = D^-1/2 (A + I) D^-1/2."""
    raw = jax.random.uniform(key, (n_nodes, n_nodes))
    a = (raw < edge_prob).astype(jnp.float32)
    a = jnp.maximum(a, a.T)                      # symmetrize
    a = a + jnp.eye(n_nodes, dtype=jnp.float32)  # self-loops
    deg = a.sum(axis=1)
    d_inv_sqrt = 1.0 / jnp.sqrt(deg)
    return a * d_inv_sqrt[:, None] * d_inv_sqrt[None, :]


if __name__ == "__main__":
    # Small, deterministic problem: 64-node graph, 16 input feats,
    # 32 hidden, 8 classes, n_layers=2 -> 3 GCNConv layers total.
    N_NODES = 64
    IN_FEATS = 16
    N_HIDDEN = 32
    N_CLASSES = 8
    N_LAYERS = 2

    key = jax.random.PRNGKey(0)
    k_graph, k_feat, k_param = jax.random.split(key, 3)

    a_hat = make_normalized_adjacency(k_graph, N_NODES)
    features = jax.random.normal(k_feat, (N_NODES, IN_FEATS), jnp.float32)
    params = make_params(k_param, IN_FEATS, N_HIDDEN, N_CLASSES, N_LAYERS)

    out = jax.block_until_ready(gcn_forward(a_hat, features, params))

    # Reference check in plain JAX (same math, no Pallas).
    h_ref = features
    for idx, (w, b) in enumerate(params):
        h_ref = a_hat @ (h_ref @ w) + b
        if idx != len(params) - 1:
            h_ref = jnp.maximum(h_ref, 0.0)
    assert out.shape == (N_NODES, N_CLASSES)
    assert jnp.allclose(out, h_ref, atol=1e-4, rtol=1e-4)

    print("KERNEL_OK")
</pallas_src>

<mosaic_0001>
module attributes {stable_mosaic.version = 11 : i64} {
  func.func @_gcn_fused_kernel(%arg0: memref<128x128xf32, #tpu.memory_space<vmem>>, %arg1: memref<128x128xf32, #tpu.memory_space<vmem>>, %arg2: memref<128x128xf32, #tpu.memory_space<vmem>>, %arg3: memref<128x128xf32, #tpu.memory_space<vmem>>, %arg4: memref<128x128xf32, #tpu.memory_space<vmem>>, %arg5: memref<1x128xf32, #tpu.memory_space<vmem>>, %arg6: memref<1x128xf32, #tpu.memory_space<vmem>>, %arg7: memref<1x128xf32, #tpu.memory_space<vmem>>, %arg8: memref<128x128xf32, #tpu.memory_space<vmem>>) attributes {dimension_semantics = [], scalar_prefetch = 0 : i64, scratch_operands = 0 : i64, tpu.core_type = #tpu.core_type<tc>} {
    %c0 = arith.constant 0 : index
    %c0_0 = arith.constant 0 : index
    %0 = vector.load %arg0[%c0, %c0_0] : memref<128x128xf32, #tpu.memory_space<vmem>>, vector<128x128xf32>
    %c0_1 = arith.constant 0 : index
    %c0_2 = arith.constant 0 : index
    %1 = vector.load %arg1[%c0_1, %c0_2] : memref<128x128xf32, #tpu.memory_space<vmem>>, vector<128x128xf32>
    %c0_3 = arith.constant 0 : index
    %c0_4 = arith.constant 0 : index
    %2 = vector.load %arg2[%c0_3, %c0_4] : memref<128x128xf32, #tpu.memory_space<vmem>>, vector<128x128xf32>
    %cst = arith.constant dense<0.000000e+00> : vector<128x128xf32>
    %3 = tpu.matmul %1, %2, %cst {dimension_numbers = #tpu.dot_dimension_numbers<[1], [0], [0], [1], [0, 0, 1, 1], [], []>} : vector<128x128xf32>, vector<128x128xf32>, vector<128x128xf32> -> vector<128x128xf32>
    %cst_5 = arith.constant dense<0.000000e+00> : vector<128x128xf32>
    %4 = tpu.matmul %0, %3, %cst_5 {dimension_numbers = #tpu.dot_dimension_numbers<[1], [0], [0], [1], [0, 0, 1, 1], [], []>} : vector<128x128xf32>, vector<128x128xf32>, vector<128x128xf32> -> vector<128x128xf32>
    %c0_6 = arith.constant 0 : index
    %c0_7 = arith.constant 0 : index
    %5 = vector.load %arg5[%c0_6, %c0_7] : memref<1x128xf32, #tpu.memory_space<vmem>>, vector<1x128xf32>
    %6 = vector.broadcast %5 : vector<1x128xf32> to vector<128x128xf32>
    %7 = arith.addf %4, %6 : vector<128x128xf32>
    %cst_8 = arith.constant 0.000000e+00 : f32
    %8 = vector.broadcast %cst_8 : f32 to vector<128x128xf32>
    %9 = arith.maximumf %7, %8 : vector<128x128xf32>
    %c0_9 = arith.constant 0 : index
    %c0_10 = arith.constant 0 : index
    %10 = vector.load %arg3[%c0_9, %c0_10] : memref<128x128xf32, #tpu.memory_space<vmem>>, vector<128x128xf32>
    %cst_11 = arith.constant dense<0.000000e+00> : vector<128x128xf32>
    %11 = tpu.matmul %9, %10, %cst_11 {dimension_numbers = #tpu.dot_dimension_numbers<[1], [0], [0], [1], [0, 0, 1, 1], [], []>} : vector<128x128xf32>, vector<128x128xf32>, vector<128x128xf32> -> vector<128x128xf32>
    %cst_12 = arith.constant dense<0.000000e+00> : vector<128x128xf32>
    %12 = tpu.matmul %0, %11, %cst_12 {dimension_numbers = #tpu.dot_dimension_numbers<[1], [0], [0], [1], [0, 0, 1, 1], [], []>} : vector<128x128xf32>, vector<128x128xf32>, vector<128x128xf32> -> vector<128x128xf32>
    %c0_13 = arith.constant 0 : index
    %c0_14 = arith.constant 0 : index
    %13 = vector.load %arg6[%c0_13, %c0_14] : memref<1x128xf32, #tpu.memory_space<vmem>>, vector<1x128xf32>
    %14 = vector.broadcast %13 : vector<1x128xf32> to vector<128x128xf32>
    %15 = arith.addf %12, %14 : vector<128x128xf32>
    %cst_15 = arith.constant 0.000000e+00 : f32
    %16 = vector.broadcast %cst_15 : f32 to vector<128x128xf32>
    %17 = arith.maximumf %15, %16 : vector<128x128xf32>
    %c0_16 = arith.constant 0 : index
    %c0_17 = arith.constant 0 : index
    %18 = vector.load %arg4[%c0_16, %c0_17] : memref<128x128xf32, #tpu.memory_space<vmem>>, vector<128x128xf32>
    %cst_18 = arith.constant dense<0.000000e+00> : vector<128x128xf32>
    %19 = tpu.matmul %17, %18, %cst_18 {dimension_numbers = #tpu.dot_dimension_numbers<[1], [0], [0], [1], [0, 0, 1, 1], [], []>} : vector<128x128xf32>, vector<128x128xf32>, vector<128x128xf32> -> vector<128x128xf32>
    %cst_19 = arith.constant dense<0.000000e+00> : vector<128x128xf32>
    %20 = tpu.matmul %0, %19, %cst_19 {dimension_numbers = #tpu.dot_dimension_numbers<[1], [0], [0], [1], [0, 0, 1, 1], [], []>} : vector<128x128xf32>, vector<128x128xf32>, vector<128x128xf32> -> vector<128x128xf32>
    %c0_20 = arith.constant 0 : index
    %c0_21 = arith.constant 0 : index
    %21 = vector.load %arg7[%c0_20, %c0_21] : memref<1x128xf32, #tpu.memory_space<vmem>>, vector<1x128xf32>
    %22 = vector.broadcast %21 : vector<1x128xf32> to vector<128x128xf32>
    %23 = arith.addf %20, %22 : vector<128x128xf32>
    %c0_22 = arith.constant 0 : index
    %c0_23 = arith.constant 0 : index
    %24 = vector.load %arg8[%c0_22, %c0_23] : memref<128x128xf32, #tpu.memory_space<vmem>>, vector<128x128xf32>
    tpu.vector_store %arg8[%c0_22, %c0_23], %23 {strides = array<i32>} : memref<128x128xf32, #tpu.memory_space<vmem>>, vector<128x128xf32>,
    return
  }
}

</mosaic_0001>

<llo_original>
// kernel: tpu_custom_call.1
$region0: #{tpu_custom_call.1}
  #allocation0 [shape = 'u32[]', space=smem, size = 0x4, offset = 0x4, fixed_abs, tag = 'smem constant byte address 0x4 - core index']
  #allocation1 [shape = 'u32[72,128]{1,0:T(1,128)}', space=vmem, size = 0x9000, scoped, tag = 'internal scratch']
  %s0 = inlined_call_operand.hbm [shape: f32[128,128], index: 0, kind: input, shape index: {}]
  %s1 = inlined_call_operand.hbm [shape: f32[128,128], index: 1, kind: input, shape index: {}]
  %s2 = inlined_call_operand.hbm [shape: f32[128,128], index: 2, kind: input, shape index: {}]
  %s3 = inlined_call_operand.hbm [shape: f32[128,128], index: 3, kind: input, shape index: {}]
  %s4 = inlined_call_operand.hbm [shape: f32[128,128], index: 4, kind: input, shape index: {}]
  %s5 = inlined_call_operand.vmem [shape: f32[1,128], index: 5, kind: input, shape index: {}]
  %s6 = inlined_call_operand.vmem [shape: f32[1,128], index: 6, kind: input, shape index: {}]
  %s7 = inlined_call_operand.vmem [shape: f32[1,128], index: 7, kind: input, shape index: {}]
  %s8 = inlined_call_operand.hbm [shape: f32[128,128], index: 8, kind: output, shape index: {}]
  %s9 = sld [smem:[#allocation0]]
  $region62: #{tpu_custom_call.1} parent=0
    _
  %s11 = ssub.s32 1, %s9
  %s12 = scalar_select 0, %s11, %s9
  $region1: #{tpu_custom_call.1} parent=0
    #allocation2 [shape = 'u8[65536]{0}', space=vmem, size = 0x10000, scoped, tag = 'input window, operand 0, single buffered']
    #allocation3 [shape = 's32[1]{0}', space=sflag, size = 0x4, scoped, tag = 'scoped memory for tpu_custom_call.1']
    #allocation4 [shape = 's32[1]{0}', space=sflag, size = 0x4, scoped, tag = 'scoped memory for tpu_custom_call.1']
    #allocation5 [shape = 'u8[65536]{0}', space=vmem, size = 0x10000, scoped, tag = 'input window, operand 1, single buffered']
    #allocation6 [shape = 's32[1]{0}', space=sflag, size = 0x4, scoped, tag = 'scoped memory for tpu_custom_call.1']
    #allocation7 [shape = 'u8[65536]{0}', space=vmem, size = 0x10000, scoped, tag = 'input window, operand 2, single buffered']
    #allocation8 [shape = 'u8[65536]{0}', space=vmem, size = 0x10000, scoped, tag = 'input window, operand 3, single buffered']
    #allocation9 [shape = 's32[1]{0}', space=sflag, size = 0x4, scoped, tag = 'scoped memory for tpu_custom_call.1']
    #allocation10 [shape = 'u8[65536]{0}', space=vmem, size = 0x10000, scoped, tag = 'input window, operand 4, single buffered']
    #allocation11 [shape = 'u8[65536]{0}', space=vmem, size = 0x10000, scoped, tag = 'output window, operand 0, single buffered']
    %13 = vsyncpa [#allocation3], 0
    %14 = vsyncpa [#allocation6], 0
    %15 = vsyncpa [#allocation9], 0
    %16 = vsyncpa [#allocation4], 0
    // Predicated region
    $region2: #{tpu_custom_call.1} parent=1 // pred_check
      _
    $region3: #{tpu_custom_call.1} parent=1 // pred_check_branch
      %18 = sbr.rel (0) target = $region5
    $region4: #{tpu_custom_call.1} parent=1 // pred_region
      %20 = vsyncadd [#allocation3], 0
      %s21 = sshll.u32 %s0, 4
      %s22 = int_to_ptr.hbm [resolvable:$true] %s21
      %s23 = sshll.u32 [#allocation2], 4
      %s24 = int_to_ptr.vmem [resolvable:$true] %s23
      %29 = dma.hbm_to_vmem [thread:$0]  %s22, 2048, %s24, [#allocation3], 128, 128, 8
    $region5: #{tpu_custom_call.1} parent=1 // pred_fallthru
      _
    // Predicated region
    $region6: #{tpu_custom_call.1} parent=1 // pred_check
      _
    $region7: #{tpu_custom_call.1} parent=1 // pred_check_branch
      %31 = sbr.rel (0) target = $region9
    $region8: #{tpu_custom_call.1} parent=1 // pred_region
      %33 = vsyncadd [#allocation6], 0
      %s34 = sshll.u32 %s1, 4
      %s35 = int_to_ptr.hbm [resolvable:$true] %s34
      %s36 = sshll.u32 [#allocation5], 4
      %s37 = int_to_ptr.vmem [resolvable:$true] %s36
      %42 = dma.hbm_to_vmem [thread:$0]  %s35, 2048, %s37, [#allocation6], 128, 128, 8
    $region9: #{tpu_custom_call.1} parent=1 // pred_fallthru
      _
    // Predicated region
    $region10: #{tpu_custom_call.1} parent=1 // pred_check
      _
    $region11: #{tpu_custom_call.1} parent=1 // pred_check_branch
      %44 = sbr.rel (0) target = $region13
    $region12: #{tpu_custom_call.1} parent=1 // pred_region
      %46 = vsyncadd [#allocation6], 0
      %s47 = sshll.u32 %s2, 4
      %s48 = int_to_ptr.hbm [resolvable:$true] %s47
      %s49 = sshll.u32 [#allocation7], 4
      %s50 = int_to_ptr.vmem [resolvable:$true] %s49
      %55 = dma.hbm_to_vmem [thread:$0]  %s48, 2048, %s50, [#allocation6], 128, 128, 8
    $region13: #{tpu_custom_call.1} parent=1 // pred_fallthru
      _
    // Predicated region
    $region14: #{tpu_custom_call.1} parent=1 // pred_check
      _
    $region15: #{tpu_custom_call.1} parent=1 // pred_check_branch
      %57 = sbr.rel (0) target = $region17
    $region16: #{tpu_custom_call.1} parent=1 // pred_region
      %59 = vsyncadd [#allocation9], 0
      %s60 = sshll.u32 %s3, 4
      %s61 = int_to_ptr.hbm [resolvable:$true] %s60
      %s62 = sshll.u32 [#allocation8], 4
      %s63 = int_to_ptr.vmem [resolvable:$true] %s62
      %68 = dma.hbm_to_vmem [thread:$0]  %s61, 2048, %s63, [#allocation9], 128, 128, 8
    $region17: #{tpu_custom_call.1} parent=1 // pred_fallthru
      _
    // Predicated region
    $region18: #{tpu_custom_call.1} parent=1 // pred_check
      _
    $region19: #{tpu_custom_call.1} parent=1 // pred_check_branch
      %70 = sbr.rel (0) target = $region21
    $region20: #{tpu_custom_call.1} parent=1 // pred_region
      %72 = vsyncadd [#allocation9], 0
      %s73 = sshll.u32 %s4, 4
      %s74 = int_to_ptr.hbm [resolvable:$true] %s73
      %s75 = sshll.u32 [#allocation10], 4
      %s76 = int_to_ptr.vmem [resolvable:$true] %s75
      %81 = dma.hbm_to_vmem [thread:$0]  %s74, 2048, %s76, [#allocation9], 128, 128, 8
    $region21: #{tpu_custom_call.1} parent=1 // pred_fallthru
      _
    // Predicated region
    $region22: #{tpu_custom_call.1} parent=1 // pred_check
      _
    $region23: #{tpu_custom_call.1} parent=1 // pred_check_branch
      %83 = sbr.rel (0) target = $region25
    $region24: #{tpu_custom_call.1} parent=1 // pred_region
      _
    $region25: #{tpu_custom_call.1} parent=1 // pred_fallthru
      _
    // Predicated region
    $region26: #{tpu_custom_call.1} parent=1 // pred_check
      _
    $region27: #{tpu_custom_call.1} parent=1 // pred_check_branch
      %85 = sbr.rel (0) target = $region29
    $region28: #{tpu_custom_call.1} parent=1 // pred_region
      _
    $region29: #{tpu_custom_call.1} parent=1 // pred_fallthru
      _
    // Predicated region
    $region30: #{tpu_custom_call.1} parent=1 // pred_check
      _
    $region31: #{tpu_custom_call.1} parent=1 // pred_check_branch
      %87 = sbr.rel (0) target = $region33
    $region32: #{tpu_custom_call.1} parent=1 // pred_region
      _
    $region33: #{tpu_custom_call.1} parent=1 // pred_fallthru
      _
    // Predicated region
    $region34: #{tpu_custom_call.1} parent=1 // pred_check
      _
    $region35: #{tpu_custom_call.1} parent=1 // pred_check_branch
      %89 = sbr.rel (0) target = $region37
    $region36: #{tpu_custom_call.1} parent=1 // pred_region
      %91 = dma.done [#allocation3], 2048
    $region37: #{tpu_custom_call.1} parent=1 // pred_fallthru
      _
    // Predicated region
    $region38: #{tpu_custom_call.1} parent=1 // pred_check
      _
    $region39: #{tpu_custom_call.1} parent=1 // pred_check_branch
      %93 = sbr.rel (0) target = $region41
    $region40: #{tpu_custom_call.1} parent=1 // pred_region
      %95 = dma.done [#allocation6], 2048
    $region41: #{tpu_custom_call.1} parent=1 // pred_fallthru
      _
    // Predicated region
    $region42: #{tpu_custom_call.1} parent=1 // pred_check
      _
    $region43: #{tpu_custom_call.1} parent=1 // pred_check_branch
      %97 = sbr.rel (0) target = $region45
    $region44: #{tpu_custom_call.1} parent=1 // pred_region
      %99 = dma.done [#allocation6], 2048
    $region45: #{tpu_custom_call.1} parent=1 // pred_fallthru
      _
    // Predicated region
    $region46: #{tpu_custom_call.1} parent=1 // pred_check
      _
    $region47: #{tpu_custom_call.1} parent=1 // pred_check_branch
      %101 = sbr.rel (0) target = $region49
    $region48: #{tpu_custom_call.1} parent=1 // pred_region
      %103 = dma.done [#allocation9], 2048
    $region49: #{tpu_custom_call.1} parent=1 // pred_fallthru
      _
    // Predicated region
    $region50: #{tpu_custom_call.1} parent=1 // pred_check
      _
    $region51: #{tpu_custom_call.1} parent=1 // pred_check_branch
      %105 = sbr.rel (0) target = $region53
    $region52: #{tpu_custom_call.1} parent=1 // pred_region
      %107 = dma.done [#allocation9], 2048
    $region53: #{tpu_custom_call.1} parent=1 // pred_fallthru
      _
    %v108 = vld [vmem:[#allocation2] sm:$0xff]
    %v109 = vld [vmem:[#allocation2 + $0x8] sm:$0xff]
    %v110 = vld [vmem:[#allocation2 + $0x10] sm:$0xff]
    %v111 = vld [vmem:[#allocation2 + $0x18] sm:$0xff]
    %v112 = vld [vmem:[#allocation2 + $0x20] sm:$0xff]
    %v113 = vld [vmem:[#allocation2 + $0x28] sm:$0xff]
    %v114 = vld [vmem:[#allocation2 + $0x30] sm:$0xff]
    %v115 = vld [vmem:[#allocation2 + $0x38] sm:$0xff]
    %v116 = vld [vmem:[#allocation2 + $0x40] sm:$0xff]
    %v117 = vld [vmem:[#allocation2 + $0x48] sm:$0xff]
    %v118 = vld [vmem:[#allocation2 + $0x50] sm:$0xff]
    %v119 = vld [vmem:[#allocation2 + $0x58] sm:$0xff]
    %v120 = vld [vmem:[#allocation2 + $0x60] sm:$0xff]
    %v121 = vld [vmem:[#allocation2 + $0x68] sm:$0xff]
    %v122 = vld [vmem:[#allocation2 + $0x70] sm:$0xff]
    %v123 = vld [vmem:[#allocation2 + $0x78] sm:$0xff]
    %v124 = vld [vmem:[#allocation5] sm:$0xff]
    %v125 = vld [vmem:[#allocation5 + $0x8] sm:$0xff]
    %v126 = vld [vmem:[#allocation5 + $0x10] sm:$0xff]
    %v127 = vld [vmem:[#allocation5 + $0x18] sm:$0xff]
    %v128 = vld [vmem:[#allocation5 + $0x20] sm:$0xff]
    %v129 = vld [vmem:[#allocation5 + $0x28] sm:$0xff]
    %v130 = vld [vmem:[#allocation5 + $0x30] sm:$0xff]
    %v131 = vld [vmem:[#allocation5 + $0x38] sm:$0xff]
    %v132 = vld [vmem:[#allocation5 + $0x40] sm:$0xff]
    %v133 = vld [vmem:[#allocation5 + $0x48] sm:$0xff]
    %v134 = vld [vmem:[#allocation5 + $0x50] sm:$0xff]
    %v135 = vld [vmem:[#allocation5 + $0x58] sm:$0xff]
    %v136 = vld [vmem:[#allocation5 + $0x60] sm:$0xff]
    %v137 = vld [vmem:[#allocation5 + $0x68] sm:$0xff]
    %v138 = vld [vmem:[#allocation5 + $0x70] sm:$0xff]
    %v139 = vld [vmem:[#allocation5 + $0x78] sm:$0xff]
    %v140 = vld [vmem:[#allocation7] sm:$0xff]
    %v141 = vld [vmem:[#allocation7 + $0x8] sm:$0xff]
    %v142 = vld [vmem:[#allocation7 + $0x10] sm:$0xff]
    %v143 = vld [vmem:[#allocation7 + $0x18] sm:$0xff]
    %v144 = vld [vmem:[#allocation7 + $0x20] sm:$0xff]
    %v145 = vld [vmem:[#allocation7 + $0x28] sm:$0xff]
    %v146 = vld [vmem:[#allocation7 + $0x30] sm:$0xff]
    %v147 = vld [vmem:[#allocation7 + $0x38] sm:$0xff]
    %v148 = vld [vmem:[#allocation7 + $0x40] sm:$0xff]
    %v149 = vld [vmem:[#allocation7 + $0x48] sm:$0xff]
    %v150 = vld [vmem:[#allocation7 + $0x50] sm:$0xff]
    %v151 = vld [vmem:[#allocation7 + $0x58] sm:$0xff]
    %v152 = vld [vmem:[#allocation7 + $0x60] sm:$0xff]
    %v153 = vld [vmem:[#allocation7 + $0x68] sm:$0xff]
    %v154 = vld [vmem:[#allocation7 + $0x70] sm:$0xff]
    %v155 = vld [vmem:[#allocation7 + $0x78] sm:$0xff]
    %156 = vmatpush.msra.mxu0 %v155
    %157 = vmatpush.msra.mxu0 %v154
    %158 = vmatpush.msra.mxu0 %v153
    %159 = vmatpush.msra.mxu0 %v152
    %160 = vmatpush.msra.mxu0 %v151
    %161 = vmatpush.msra.mxu0 %v150
    %162 = vmatpush.msra.mxu0 %v149
    %163 = vmatpush.msra.mxu0 %v148
    %164 = vmatpush.msra.mxu0 %v147
    %165 = vmatpush.msra.mxu0 %v146
    %166 = vmatpush.msra.mxu0 %v145
    %167 = vmatpush.msra.mxu0 %v144
    %168 = vmatpush.msra.mxu0 %v143
    %169 = vmatpush.msra.mxu0 %v142
    %170 = vmatpush.msra.mxu0 %v141
    %171 = vmatpush.msra.mxu0 %v140
    %172 = vmatmul.f32.gmra.mxu0 %v124
    %v173 = vpop.f32.mrf.mxu0
    %v174 = vadd.f32 0.0, %v173
    %175 = vmatmul.f32.gmra.mxu0 %v125
    %v176 = vpop.f32.mrf.mxu0
    %v177 = vadd.f32 0.0, %v176
    %178 = vmatmul.f32.gmra.mxu0 %v126
    %v179 = vpop.f32.mrf.mxu0
    %v180 = vadd.f32 0.0, %v179
    %181 = vmatmul.f32.gmra.mxu0 %v127
    %v182 = vpop.f32.mrf.mxu0
    %v183 = vadd.f32 0.0, %v182
    %184 = vmatmul.f32.gmra.mxu0 %v128
    %v185 = vpop.f32.mrf.mxu0
    %v186 = vadd.f32 0.0, %v185
    %187 = vmatmul.f32.gmra.mxu0 %v129
    %v188 = vpop.f32.mrf.mxu0
    %v189 = vadd.f32 0.0, %v188
    %190 = vmatmul.f32.gmra.mxu0 %v130
    %v191 = vpop.f32.mrf.mxu0
    %v192 = vadd.f32 0.0, %v191
    %193 = vmatmul.f32.gmra.mxu0 %v131
    %v194 = vpop.f32.mrf.mxu0
    %v195 = vadd.f32 0.0, %v194
    %196 = vmatmul.f32.gmra.mxu0 %v132
    %v197 = vpop.f32.mrf.mxu0
    %v198 = vadd.f32 0.0, %v197
    %199 = vmatmul.f32.gmra.mxu0 %v133
    %v200 = vpop.f32.mrf.mxu0
    %v201 = vadd.f32 0.0, %v200
    %202 = vmatmul.f32.gmra.mxu0 %v134
    %v203 = vpop.f32.mrf.mxu0
    %v204 = vadd.f32 0.0, %v203
    %205 = vmatmul.f32.gmra.mxu0 %v135
    %v206 = vpop.f32.mrf.mxu0
    %v207 = vadd.f32 0.0, %v206
    %208 = vmatmul.f32.gmra.mxu0 %v136
    %v209 = vpop.f32.mrf.mxu0
    %v210 = vadd.f32 0.0, %v209
    %211 = vmatmul.f32.gmra.mxu0 %v137
    %v212 = vpop.f32.mrf.mxu0
    %v213 = vadd.f32 0.0, %v212
    %214 = vmatmul.f32.gmra.mxu0 %v138
    %v215 = vpop.f32.mrf.mxu0
    %v216 = vadd.f32 0.0, %v215
    %217 = vmatmul.f32.gmra.mxu0 %v139
    %v218 = vpop.f32.mrf.mxu0
    %v219 = vadd.f32 0.0, %v218
    %220 = vdwg.mxu0
    %v221 = vld [vmem:[%s5] sm:$0x1]
    %v223 = vperm.slane %v221, 0
    %225 = vmatpush.msra.mxu0 %v219
    %226 = vmatpush.msra.mxu0 %v216
    %227 = vmatpush.msra.mxu0 %v213
    %228 = vmatpush.msra.mxu0 %v210
    %229 = vmatpush.msra.mxu0 %v207
    %230 = vmatpush.msra.mxu0 %v204
    %231 = vmatpush.msra.mxu0 %v201
    %232 = vmatpush.msra.mxu0 %v198
    %233 = vmatpush.msra.mxu0 %v195
    %234 = vmatpush.msra.mxu0 %v192
    %235 = vmatpush.msra.mxu0 %v189
    %236 = vmatpush.msra.mxu0 %v186
    %237 = vmatpush.msra.mxu0 %v183
    %238 = vmatpush.msra.mxu0 %v180
    %239 = vmatpush.msra.mxu0 %v177
    %240 = vmatpush.msra.mxu0 %v174
    %241 = vmatmul.f32.gmra.mxu0 %v108
    %v242 = vpop.f32.mrf.mxu0
    %v243 = vadd.f32 %v223, %v242
    %244 = vmatmul.f32.gmra.mxu0 %v109
    %v245 = vpop.f32.mrf.mxu0
    %v246 = vadd.f32 %v223, %v245
    %247 = vmatmul.f32.gmra.mxu0 %v110
    %v248 = vpop.f32.mrf.mxu0
    %v249 = vadd.f32 %v223, %v248
    %250 = vmatmul.f32.gmra.mxu0 %v111
    %v251 = vpop.f32.mrf.mxu0
    %v252 = vadd.f32 %v223, %v251
    %253 = vmatmul.f32.gmra.mxu0 %v112
    %v254 = vpop.f32.mrf.mxu0
    %v255 = vadd.f32 %v223, %v254
    %256 = vmatmul.f32.gmra.mxu0 %v113
    %v257 = vpop.f32.mrf.mxu0
    %v258 = vadd.f32 %v223, %v257
    %259 = vmatmul.f32.gmra.mxu0 %v114
    %v260 = vpop.f32.mrf.mxu0
    %v261 = vadd.f32 %v223, %v260
    %262 = vmatmul.f32.gmra.mxu0 %v115
    %v263 = vpop.f32.mrf.mxu0
    %v264 = vadd.f32 %v223, %v263
    %265 = vmatmul.f32.gmra.mxu0 %v116
    %v266 = vpop.f32.mrf.mxu0
    %v267 = vadd.f32 %v223, %v266
    %268 = vmatmul.f32.gmra.mxu0 %v117
    %v269 = vpop.f32.mrf.mxu0
    %v270 = vadd.f32 %v223, %v269
    %271 = vmatmul.f32.gmra.mxu0 %v118
    %v272 = vpop.f32.mrf.mxu0
    %v273 = vadd.f32 %v223, %v272
    %274 = vmatmul.f32.gmra.mxu0 %v119
    %v275 = vpop.f32.mrf.mxu0
    %v276 = vadd.f32 %v223, %v275
    %277 = vmatmul.f32.gmra.mxu0 %v120
    %v278 = vpop.f32.mrf.mxu0
    %v279 = vadd.f32 %v223, %v278
    %280 = vmatmul.f32.gmra.mxu0 %v121
    %v281 = vpop.f32.mrf.mxu0
    %v282 = vadd.f32 %v223, %v281
    %283 = vmatmul.f32.gmra.mxu0 %v122
    %v284 = vpop.f32.mrf.mxu0
    %v285 = vadd.f32 %v223, %v284
    %286 = vmatmul.f32.gmra.mxu0 %v123
    %v287 = vpop.f32.mrf.mxu0
    %v288 = vadd.f32 %v223, %v287
    %289 = vdwg.mxu0
    %v290 = vmax.f32 %v243, 0.0
    %v291 = vmax.f32 %v246, 0.0
    %v292 = vmax.f32 %v249, 0.0
    %v293 = vmax.f32 %v252, 0.0
    %v294 = vmax.f32 %v255, 0.0
    %v295 = vmax.f32 %v258, 0.0
    %v296 = vmax.f32 %v261, 0.0
    %v297 = vmax.f32 %v264, 0.0
    %v298 = vmax.f32 %v267, 0.0
    %v299 = vmax.f32 %v270, 0.0
    %v300 = vmax.f32 %v273, 0.0
    %v301 = vmax.f32 %v276, 0.0
    %v302 = vmax.f32 %v279, 0.0
    %v303 = vmax.f32 %v282, 0.0
    %v304 = vmax.f32 %v285, 0.0
    %v305 = vmax.f32 %v288, 0.0
    %v306 = vld [vmem:[#allocation8] sm:$0xff]
    %v307 = vld [vmem:[#allocation8 + $0x8] sm:$0xff]
    %v308 = vld [vmem:[#allocation8 + $0x10] sm:$0xff]
    %v309 = vld [vmem:[#allocation8 + $0x18] sm:$0xff]
    %v310 = vld [vmem:[#allocation8 + $0x20] sm:$0xff]
    %v311 = vld [vmem:[#allocation8 + $0x28] sm:$0xff]
    %v312 = vld [vmem:[#allocation8 + $0x30] sm:$0xff]
    %v313 = vld [vmem:[#allocation8 + $0x38] sm:$0xff]
    %v314 = vld [vmem:[#allocation8 + $0x40] sm:$0xff]
    %v315 = vld [vmem:[#allocation8 + $0x48] sm:$0xff]
    %v316 = vld [vmem:[#allocation8 + $0x50] sm:$0xff]
    %v317 = vld [vmem:[#allocation8 + $0x58] sm:$0xff]
    %v318 = vld [vmem:[#allocation8 + $0x60] sm:$0xff]
    %v319 = vld [vmem:[#allocation8 + $0x68] sm:$0xff]
    %v320 = vld [vmem:[#allocation8 + $0x70] sm:$0xff]
    %v321 = vld [vmem:[#allocation8 + $0x78] sm:$0xff]
    %322 = vmatpush.msra.mxu0 %v321
    %323 = vmatpush.msra.mxu0 %v320
    %324 = vmatpush.msra.mxu0 %v319
    %325 = vmatpush.msra.mxu0 %v318
    %326 = vmatpush.msra.mxu0 %v317
    %327 = vmatpush.msra.mxu0 %v316
    %328 = vmatpush.msra.mxu0 %v315
    %329 = vmatpush.msra.mxu0 %v314
    %330 = vmatpush.msra.mxu0 %v313
    %331 = vmatpush.msra.mxu0 %v312
    %332 = vmatpush.msra.mxu0 %v311
    %333 = vmatpush.msra.mxu0 %v310
    %334 = vmatpush.msra.mxu0 %v309
    %335 = vmatpush.msra.mxu0 %v308
    %336 = vmatpush.msra.mxu0 %v307
    %337 = vmatpush.msra.mxu0 %v306
    %338 = vmatmul.f32.gmra.mxu0 %v290
    %v339 = vpop.f32.mrf.mxu0
    %v340 = vadd.f32 0.0, %v339
    %341 = vmatmul.f32.gmra.mxu0 %v291
    %v342 = vpop.f32.mrf.mxu0
    %v343 = vadd.f32 0.0, %v342
    %344 = vmatmul.f32.gmra.mxu0 %v292
    %v345 = vpop.f32.mrf.mxu0
    %v346 = vadd.f32 0.0, %v345
    %347 = vmatmul.f32.gmra.mxu0 %v293
    %v348 = vpop.f32.mrf.mxu0
    %v349 = vadd.f32 0.0, %v348
    %350 = vmatmul.f32.gmra.mxu0 %v294
    %v351 = vpop.f32.mrf.mxu0
    %v352 = vadd.f32 0.0, %v351
    %353 = vmatmul.f32.gmra.mxu0 %v295
    %v354 = vpop.f32.mrf.mxu0
    %v355 = vadd.f32 0.0, %v354
    %356 = vmatmul.f32.gmra.mxu0 %v296
    %v357 = vpop.f32.mrf.mxu0
    %v358 = vadd.f32 0.0, %v357
    %359 = vmatmul.f32.gmra.mxu0 %v297
    %v360 = vpop.f32.mrf.mxu0
    %v361 = vadd.f32 0.0, %v360
    %362 = vmatmul.f32.gmra.mxu0 %v298
    %v363 = vpop.f32.mrf.mxu0
    %v364 = vadd.f32 0.0, %v363
    %365 = vmatmul.f32.gmra.mxu0 %v299
    %v366 = vpop.f32.mrf.mxu0
    %v367 = vadd.f32 0.0, %v366
    %368 = vmatmul.f32.gmra.mxu0 %v300
    %v369 = vpop.f32.mrf.mxu0
    %v370 = vadd.f32 0.0, %v369
    %371 = vmatmul.f32.gmra.mxu0 %v301
    %v372 = vpop.f32.mrf.mxu0
    %v373 = vadd.f32 0.0, %v372
    %374 = vmatmul.f32.gmra.mxu0 %v302
    %v375 = vpop.f32.mrf.mxu0
    %v376 = vadd.f32 0.0, %v375
    %377 = vmatmul.f32.gmra.mxu0 %v303
    %v378 = vpop.f32.mrf.mxu0
    %v379 = vadd.f32 0.0, %v378
    %380 = vmatmul.f32.gmra.mxu0 %v304
    %v381 = vpop.f32.mrf.mxu0
    %v382 = vadd.f32 0.0, %v381
    %383 = vmatmul.f32.gmra.mxu0 %v305
    %v384 = vpop.f32.mrf.mxu0
    %v385 = vadd.f32 0.0, %v384
    %386 = vdwg.mxu0
    %v387 = vld [vmem:[%s6] sm:$0x1]
    %v389 = vperm.slane %v387, 0
    %391 = vmatpush.msra.mxu0 %v385
    %392 = vmatpush.msra.mxu0 %v382
    %393 = vmatpush.msra.mxu0 %v379
    %394 = vmatpush.msra.mxu0 %v376
    %395 = vmatpush.msra.mxu0 %v373
    %396 = vmatpush.msra.mxu0 %v370
    %397 = vmatpush.msra.mxu0 %v367
    %398 = vmatpush.msra.mxu0 %v364
    %399 = vmatpush.msra.mxu0 %v361
    %400 = vmatpush.msra.mxu0 %v358
    %401 = vmatpush.msra.mxu0 %v355
    %402 = vmatpush.msra.mxu0 %v352
    %403 = vmatpush.msra.mxu0 %v349
    %404 = vmatpush.msra.mxu0 %v346
    %405 = vmatpush.msra.mxu0 %v343
    %406 = vmatpush.msra.mxu0 %v340
    %407 = vmatmul.f32.gmra.mxu0 %v108
    %v408 = vpop.f32.mrf.mxu0
    %v409 = vadd.f32 %v389, %v408
    %410 = vmatmul.f32.gmra.mxu0 %v109
    %v411 = vpop.f32.mrf.mxu0
    %v412 = vadd.f32 %v389, %v411
    %413 = vmatmul.f32.gmra.mxu0 %v110
    %v414 = vpop.f32.mrf.mxu0
    %v415 = vadd.f32 %v389, %v414
    %416 = vmatmul.f32.gmra.mxu0 %v111
    %v417 = vpop.f32.mrf.mxu0
    %v418 = vadd.f32 %v389, %v417
    %419 = vmatmul.f32.gmra.mxu0 %v112
    %v420 = vpop.f32.mrf.mxu0
    %v421 = vadd.f32 %v389, %v420
    %422 = vmatmul.f32.gmra.mxu0 %v113
    %v423 = vpop.f32.mrf.mxu0
    %v424 = vadd.f32 %v389, %v423
    %425 = vmatmul.f32.gmra.mxu0 %v114
    %v426 = vpop.f32.mrf.mxu0
    %v427 = vadd.f32 %v389, %v426
    %428 = vmatmul.f32.gmra.mxu0 %v115
    %v429 = vpop.f32.mrf.mxu0
    %v430 = vadd.f32 %v389, %v429
    %431 = vmatmul.f32.gmra.mxu0 %v116
    %v432 = vpop.f32.mrf.mxu0
    %v433 = vadd.f32 %v389, %v432
    %434 = vmatmul.f32.gmra.mxu0 %v117
    %v435 = vpop.f32.mrf.mxu0
    %v436 = vadd.f32 %v389, %v435
    %437 = vmatmul.f32.gmra.mxu0 %v118
    %v438 = vpop.f32.mrf.mxu0
    %v439 = vadd.f32 %v389, %v438
    %440 = vmatmul.f32.gmra.mxu0 %v119
    %v441 = vpop.f32.mrf.mxu0
    %v442 = vadd.f32 %v389, %v441
    %443 = vmatmul.f32.gmra.mxu0 %v120
    %v444 = vpop.f32.mrf.mxu0
    %v445 = vadd.f32 %v389, %v444
    %446 = vmatmul.f32.gmra.mxu0 %v121
    %v447 = vpop.f32.mrf.mxu0
    %v448 = vadd.f32 %v389, %v447
    %449 = vmatmul.f32.gmra.mxu0 %v122
    %v450 = vpop.f32.mrf.mxu0
    %v451 = vadd.f32 %v389, %v450
    %452 = vmatmul.f32.gmra.mxu0 %v123
    %v453 = vpop.f32.mrf.mxu0
    %v454 = vadd.f32 %v389, %v453
    %455 = vdwg.mxu0
    %v456 = vmax.f32 %v409, 0.0
    %v457 = vmax.f32 %v412, 0.0
    %v458 = vmax.f32 %v415, 0.0
    %v459 = vmax.f32 %v418, 0.0
    %v460 = vmax.f32 %v421, 0.0
    %v461 = vmax.f32 %v424, 0.0
    %v462 = vmax.f32 %v427, 0.0
    %v463 = vmax.f32 %v430, 0.0
    %v464 = vmax.f32 %v433, 0.0
    %v465 = vmax.f32 %v436, 0.0
    %v466 = vmax.f32 %v439, 0.0
    %v467 = vmax.f32 %v442, 0.0
    %v468 = vmax.f32 %v445, 0.0
    %v469 = vmax.f32 %v448, 0.0
    %v470 = vmax.f32 %v451, 0.0
    %v471 = vmax.f32 %v454, 0.0
    %v472 = vld [vmem:[#allocation10] sm:$0xff]
    %v473 = vld [vmem:[#allocation10 + $0x8] sm:$0xff]
    %v474 = vld [vmem:[#allocation10 + $0x10] sm:$0xff]
    %v475 = vld [vmem:[#allocation10 + $0x18] sm:$0xff]
    %v476 = vld [vmem:[#allocation10 + $0x20] sm:$0xff]
    %v477 = vld [vmem:[#allocation10 + $0x28] sm:$0xff]
    %v478 = vld [vmem:[#allocation10 + $0x30] sm:$0xff]
    %v479 = vld [vmem:[#allocation10 + $0x38] sm:$0xff]
    %v480 = vld [vmem:[#allocation10 + $0x40] sm:$0xff]
    %v481 = vld [vmem:[#allocation10 + $0x48] sm:$0xff]
    %v482 = vld [vmem:[#allocation10 + $0x50] sm:$0xff]
    %v483 = vld [vmem:[#allocation10 + $0x58] sm:$0xff]
    %v484 = vld [vmem:[#allocation10 + $0x60] sm:$0xff]
    %v485 = vld [vmem:[#allocation10 + $0x68] sm:$0xff]
    %v486 = vld [vmem:[#allocation10 + $0x70] sm:$0xff]
    %v487 = vld [vmem:[#allocation10 + $0x78] sm:$0xff]
    %488 = vmatpush.msra.mxu0 %v487
    %489 = vmatpush.msra.mxu0 %v486
    %490 = vmatpush.msra.mxu0 %v485
    %491 = vmatpush.msra.mxu0 %v484
    %492 = vmatpush.msra.mxu0 %v483
    %493 = vmatpush.msra.mxu0 %v482
    %494 = vmatpush.msra.mxu0 %v481
    %495 = vmatpush.msra.mxu0 %v480
    %496 = vmatpush.msra.mxu0 %v479
    %497 = vmatpush.msra.mxu0 %v478
    %498 = vmatpush.msra.mxu0 %v477
    %499 = vmatpush.msra.mxu0 %v476
    %500 = vmatpush.msra.mxu0 %v475
    %501 = vmatpush.msra.mxu0 %v474
    %502 = vmatpush.msra.mxu0 %v473
    %503 = vmatpush.msra.mxu0 %v472
    %504 = vmatmul.f32.gmra.mxu0 %v456
    %v505 = vpop.f32.mrf.mxu0
    %v506 = vadd.f32 0.0, %v505
    %507 = vmatmul.f32.gmra.mxu0 %v457
    %v508 = vpop.f32.mrf.mxu0
    %v509 = vadd.f32 0.0, %v508
    %510 = vmatmul.f32.gmra.mxu0 %v458
    %v511 = vpop.f32.mrf.mxu0
    %v512 = vadd.f32 0.0, %v511
    %513 = vmatmul.f32.gmra.mxu0 %v459
    %v514 = vpop.f32.mrf.mxu0
    %v515 = vadd.f32 0.0, %v514
    %516 = vmatmul.f32.gmra.mxu0 %v460
    %v517 = vpop.f32.mrf.mxu0
    %v518 = vadd.f32 0.0, %v517
    %519 = vmatmul.f32.gmra.mxu0 %v461
    %v520 = vpop.f32.mrf.mxu0
    %v521 = vadd.f32 0.0, %v520
    %522 = vmatmul.f32.gmra.mxu0 %v462
    %v523 = vpop.f32.mrf.mxu0
    %v524 = vadd.f32 0.0, %v523
    %525 = vmatmul.f32.gmra.mxu0 %v463
    %v526 = vpop.f32.mrf.mxu0
    %v527 = vadd.f32 0.0, %v526
    %528 = vmatmul.f32.gmra.mxu0 %v464
    %v529 = vpop.f32.mrf.mxu0
    %v530 = vadd.f32 0.0, %v529
    %531 = vmatmul.f32.gmra.mxu0 %v465
    %v532 = vpop.f32.mrf.mxu0
    %v533 = vadd.f32 0.0, %v532
    %534 = vmatmul.f32.gmra.mxu0 %v466
    %v535 = vpop.f32.mrf.mxu0
    %v536 = vadd.f32 0.0, %v535
    %537 = vmatmul.f32.gmra.mxu0 %v467
    %v538 = vpop.f32.mrf.mxu0
    %v539 = vadd.f32 0.0, %v538
    %540 = vmatmul.f32.gmra.mxu0 %v468
    %v541 = vpop.f32.mrf.mxu0
    %v542 = vadd.f32 0.0, %v541
    %543 = vmatmul.f32.gmra.mxu0 %v469
    %v544 = vpop.f32.mrf.mxu0
    %v545 = vadd.f32 0.0, %v544
    %546 = vmatmul.f32.gmra.mxu0 %v470
    %v547 = vpop.f32.mrf.mxu0
    %v548 = vadd.f32 0.0, %v547
    %549 = vmatmul.f32.gmra.mxu0 %v471
    %v550 = vpop.f32.mrf.mxu0
    %v551 = vadd.f32 0.0, %v550
    %552 = vdwg.mxu0
    %v553 = vld [vmem:[%s7] sm:$0x1]
    %v555 = vperm.slane %v553, 0
    %557 = vmatpush.msra.mxu0 %v551
    %558 = vmatpush.msra.mxu0 %v548
    %559 = vmatpush.msra.mxu0 %v545
    %560 = vmatpush.msra.mxu0 %v542
    %561 = vmatpush.msra.mxu0 %v539
    %562 = vmatpush.msra.mxu0 %v536
    %563 = vmatpush.msra.mxu0 %v533
    %564 = vmatpush.msra.mxu0 %v530
    %565 = vmatpush.msra.mxu0 %v527
    %566 = vmatpush.msra.mxu0 %v524
    %567 = vmatpush.msra.mxu0 %v521
    %568 = vmatpush.msra.mxu0 %v518
    %569 = vmatpush.msra.mxu0 %v515
    %570 = vmatpush.msra.mxu0 %v512
    %571 = vmatpush.msra.mxu0 %v509
    %572 = vmatpush.msra.mxu0 %v506
    %573 = vmatmul.f32.gmra.mxu0 %v108
    %v574 = vpop.f32.mrf.mxu0
    %v575 = vadd.f32 %v555, %v574
    %576 = vmatmul.f32.gmra.mxu0 %v109
    %v577 = vpop.f32.mrf.mxu0
    %v578 = vadd.f32 %v555, %v577
    %579 = vmatmul.f32.gmra.mxu0 %v110
    %v580 = vpop.f32.mrf.mxu0
    %v581 = vadd.f32 %v555, %v580
    %582 = vmatmul.f32.gmra.mxu0 %v111
    %v583 = vpop.f32.mrf.mxu0
    %v584 = vadd.f32 %v555, %v583
    %585 = vmatmul.f32.gmra.mxu0 %v112
    %v586 = vpop.f32.mrf.mxu0
    %v587 = vadd.f32 %v555, %v586
    %588 = vmatmul.f32.gmra.mxu0 %v113
    %v589 = vpop.f32.mrf.mxu0
    %v590 = vadd.f32 %v555, %v589
    %591 = vmatmul.f32.gmra.mxu0 %v114
    %v592 = vpop.f32.mrf.mxu0
    %v593 = vadd.f32 %v555, %v592
    %594 = vmatmul.f32.gmra.mxu0 %v115
    %v595 = vpop.f32.mrf.mxu0
    %v596 = vadd.f32 %v555, %v595
    %597 = vmatmul.f32.gmra.mxu0 %v116
    %v598 = vpop.f32.mrf.mxu0
    %v599 = vadd.f32 %v555, %v598
    %600 = vmatmul.f32.gmra.mxu0 %v117
    %v601 = vpop.f32.mrf.mxu0
    %v602 = vadd.f32 %v555, %v601
    %603 = vmatmul.f32.gmra.mxu0 %v118
    %v604 = vpop.f32.mrf.mxu0
    %v605 = vadd.f32 %v555, %v604
    %606 = vmatmul.f32.gmra.mxu0 %v119
    %v607 = vpop.f32.mrf.mxu0
    %v608 = vadd.f32 %v555, %v607
    %609 = vmatmul.f32.gmra.mxu0 %v120
    %v610 = vpop.f32.mrf.mxu0
    %v611 = vadd.f32 %v555, %v610
    %612 = vmatmul.f32.gmra.mxu0 %v121
    %v613 = vpop.f32.mrf.mxu0
    %v614 = vadd.f32 %v555, %v613
    %615 = vmatmul.f32.gmra.mxu0 %v122
    %v616 = vpop.f32.mrf.mxu0
    %v617 = vadd.f32 %v555, %v616
    %618 = vmatmul.f32.gmra.mxu0 %v123
    %v619 = vpop.f32.mrf.mxu0
    %v620 = vadd.f32 %v555, %v619
    %621 = vdwg.mxu0
    %622 = vst [vmem:[#allocation11] sm:$0xff] %v575
    %623 = vst [vmem:[#allocation11 + $0x8] sm:$0xff] %v578
    %624 = vst [vmem:[#allocation11 + $0x10] sm:$0xff] %v581
    %625 = vst [vmem:[#allocation11 + $0x18] sm:$0xff] %v584
    %626 = vst [vmem:[#allocation11 + $0x20] sm:$0xff] %v587
    %627 = vst [vmem:[#allocation11 + $0x28] sm:$0xff] %v590
    %628 = vst [vmem:[#allocation11 + $0x30] sm:$0xff] %v593
    %629 = vst [vmem:[#allocation11 + $0x38] sm:$0xff] %v596
    %630 = vst [vmem:[#allocation11 + $0x40] sm:$0xff] %v599
    %631 = vst [vmem:[#allocation11 + $0x48] sm:$0xff] %v602
    %632 = vst [vmem:[#allocation11 + $0x50] sm:$0xff] %v605
    %633 = vst [vmem:[#allocation11 + $0x58] sm:$0xff] %v608
    %634 = vst [vmem:[#allocation11 + $0x60] sm:$0xff] %v611
    %635 = vst [vmem:[#allocation11 + $0x68] sm:$0xff] %v614
    %636 = vst [vmem:[#allocation11 + $0x70] sm:$0xff] %v617
    %637 = vst [vmem:[#allocation11 + $0x78] sm:$0xff] %v620
    // Predicated region
    $region54: #{tpu_custom_call.1} parent=1 // pred_check
      _
    $region55: #{tpu_custom_call.1} parent=1 // pred_check_branch
      %639 = sbr.rel (0) target = $region57
    $region56: #{tpu_custom_call.1} parent=1 // pred_region
      %641 = vsyncadd [#allocation4], 0
      %s642 = sshll.u32 [#allocation11], 4
      %s643 = int_to_ptr.vmem [resolvable:$true] %s642
      %s644 = sshll.u32 %s8, 4
      %s645 = int_to_ptr.hbm [resolvable:$true] %s644
      %650 = dma.vmem_to_hbm [thread:$0]  %s643, 2048, %s645, [#allocation4], 128, 128, 8
    $region57: #{tpu_custom_call.1} parent=1 // pred_fallthru
      _
    // Predicated region
    $region58: #{tpu_custom_call.1} parent=1 // pred_check
      _
    $region59: #{tpu_custom_call.1} parent=1 // pred_check_branch
      %652 = sbr.rel (0) target = $region61
    $region60: #{tpu_custom_call.1} parent=1 // pred_region
      %654 = dma.done [#allocation4], 2048
    $region61: #{tpu_custom_call.1} parent=1 // pred_fallthru
      _
    %655 = vsyncpa [#allocation3], 1
    %656 = vsyncpa [#allocation6], 1
    %657 = vsyncpa [#allocation9], 1
    %658 = vsyncpa [#allocation4], 1

</llo_original>
